<compile_context>
chip_gen: v6e
topology: v6e:2x2x1
jax: 0.10.0
libtpu: 0.0.40
codegen_flags: <defaults>
</compile_context>

<pallas_src>
import functools

import jax
import jax.numpy as jnp
from jax.experimental import pallas as pl
from jax.experimental.pallas import tpu as pltpu


def _round_up(x, m):
    return (x + m - 1) // m * m


# ----------------------------------------------------------------------------
# Fused kernel:
#   synthetic backbone (im2col conv -> ReLU -> global-avg-pool as matmul)
#   -> bottleneck Linear -> Dropout(eval)=id -> ReLU
#   -> [BatchNorm1d(eval) folded into] weight-normalised Linear -> logits
# Four MXU matmuls (bf16 operands, f32 accumulation) + elementwise.
# ----------------------------------------------------------------------------
def classifier_kernel(patches_ref, wconv_ref, pool_ref, wb_ref, wfc_ref,
                      bias_ref, logits_ref):
    # patches_ref : (R, K)       bf16 im2col patches (K = 9*Cin, unpadded)
    # wconv_ref   : (K, Cf_p)    bf16 3x3 conv weight, flattened, lane-padded
    # pool_ref    : (N_p, R)     bf16 global-average-pool matrix
    # wb_ref      : (Cf_p, D_p)  bf16 bottleneck Linear weight (transposed)
    # wfc_ref     : (D_p, C_p)   bf16 weight-norm fc weight with BN folded in
    # bias_ref    : (8, L)  f32  row 0 = bottleneck bias, row 1 = folded fc bias
    # logits_ref  : (N_p, C_p)   f32
    d_p = wb_ref.shape[1]
    c_p = wfc_ref.shape[1]
    bias = bias_ref[...]

    # 3x3 conv (im2col) as one MXU matmul, then ReLU.
    acc = jnp.dot(patches_ref[...], wconv_ref[...],
                  preferred_element_type=jnp.float32)            # (R, Cf_p)
    acc = jnp.maximum(acc, 0.0)

    # Global average pool as a matmul (keeps everything 2-D / MXU-friendly).
    feat = jnp.dot(pool_ref[...], acc.astype(jnp.bfloat16),
                   preferred_element_type=jnp.float32)           # (N_p, Cf_p)

    # Bottleneck Linear (+bias); Dropout(p=0.5) is identity in eval mode; ReLU.
    h = jnp.dot(feat.astype(jnp.bfloat16), wb_ref[...],
                preferred_element_type=jnp.float32) + bias[0:1, :d_p]
    h = jnp.maximum(h, 0.0)

    # Weight-normalised fc with eval-mode BatchNorm folded in (done in wrapper).
    logits_ref[...] = (
        jnp.dot(h.astype(jnp.bfloat16), wfc_ref[...],
                preferred_element_type=jnp.float32) + bias[1:2, :c_p])


# ----------------------------------------------------------------------------
# One-time parameter prep (hoisted out of the per-call hot path):
# weight-norm hoist, BN fold (on unpadded params), pads, bf16 casts, pool
# matrix build, bias packing.
# ----------------------------------------------------------------------------
def prepare_params(params, input_shape):
    n, cin, h, w = input_shape
    conv_w = params["conv_w"]                     # (3, 3, Cin, Cf)
    cf = conv_w.shape[-1]
    d = params["wb"].shape[-1]
    c = params["v"].shape[-1]

    k = 9 * cin
    cf_p = _round_up(cf, 128)
    d_p = _round_up(d, 128)
    c_p = _round_up(c, 128)
    n_p = max(8, _round_up(n, 8))
    r = n * h * w

    # Conv weight flattened; lane-pad the output channels only (K stays 9*Cin).
    wconv = jnp.pad(conv_w.reshape(k, cf), ((0, 0), (0, cf_p - cf)))

    # Global-average-pool matrix: pool[i, row] = 1/(H*W) if row belongs to i.
    owner = jnp.arange(r, dtype=jnp.int32)[None, :] // (h * w)
    img = jnp.arange(n_p, dtype=jnp.int32)[:, None]
    pool = (img == owner).astype(jnp.float32) * (1.0 / (h * w))

    # Bottleneck Linear weight (transposed) and bias.
    wb = jnp.pad(params["wb"], ((0, cf_p - cf), (0, d_p - d)))
    bb = params["bb"]                              # (1, D)

    # weight_norm(fc, dim=0): W = g * v / ||v|| per output class (hoisted).
    v = params["v"]                                # (D, C)
    wfc = v * (params["g"] / jnp.sqrt(jnp.sum(v * v, axis=0, keepdims=True)))

    # Fold eval-mode BatchNorm1d (affine after the ReLU) into the fc:
    #   BN(x) = x*s + t,  s = gamma*rsqrt(var+eps),  t = beta - mean*s
    #   logits = (h*s + t) @ wfc + bfc = h @ (wfc * s^T) + (t @ wfc + bfc)
    s = params["gamma"] * jax.lax.rsqrt(params["bn_var"] + 1e-5)   # (1, D)
    t = params["beta"] - params["bn_mean"] * s                     # (1, D)
    wfc_folded = wfc * s.reshape(d, 1)                             # (D, C)
    bfc_folded = params["bfc"] + jnp.dot(t, wfc)                   # (1, C)
    wfc_folded = jnp.pad(wfc_folded, ((0, d_p - d), (0, c_p - c)))

    # Pack the two small bias vectors into one (8, L) slab (single DMA).
    l = max(d_p, c_p)
    bias = jnp.zeros((8, l), jnp.float32)
    bias = bias.at[0, :d].set(bb[0])
    bias = bias.at[1, :c].set(bfc_folded[0])

    return {
        "wconv": wconv.astype(jnp.bfloat16),
        "pool": pool.astype(jnp.bfloat16),
        "wb": wb.astype(jnp.bfloat16),
        "wfc": wfc_folded.astype(jnp.bfloat16),
        "bias": bias,
    }


# ----------------------------------------------------------------------------
# Hot path: halo pad + im2col of the small raw input, one fused pallas_call,
# slice logits back.
# ----------------------------------------------------------------------------
@functools.partial(jax.jit, static_argnames=("num_classes",))
def classifier_forward(x_nchw, prepped, num_classes):
    """x_nchw: (N, Cin, H, W) float32. Returns logits (N, num_classes)."""
    x = jnp.transpose(x_nchw, (0, 2, 3, 1)).astype(jnp.float32)    # NHWC
    n, h, w, cin = x.shape
    r = n * h * w
    k = 9 * cin
    n_p = max(8, _round_up(n, 8))
    c_p = prepped["wfc"].shape[-1]

    # Halo pad + im2col (layout plumbing on the ~10 KB raw input).
    xp = jnp.pad(x, ((0, 0), (1, 1), (1, 1), (0, 0)))
    cols = [xp[:, kh:kh + h, kw:kw + w, :]
            for kh in range(3) for kw in range(3)]
    patches = jnp.concatenate(cols, axis=-1).reshape(r, k).astype(jnp.bfloat16)

    vmem = pl.BlockSpec(memory_space=pltpu.MemorySpace.VMEM)
    logits_p = pl.pallas_call(
        classifier_kernel,
        out_shape=jax.ShapeDtypeStruct((n_p, c_p), jnp.float32),
        in_specs=[vmem] * 6,
        out_specs=vmem,
    )(patches, prepped["wconv"], prepped["pool"], prepped["wb"],
      prepped["wfc"], prepped["bias"])

    return logits_p[:n, :num_classes]


def init_params(key, cin=4, feat_dim=32, bottleneck_dim=16, num_classes=10):
    ks = jax.random.split(key, 8)
    return {
        # synthetic backbone conv: (3, 3, Cin, feat_dim)
        "conv_w": 0.1 * jax.random.normal(ks[0], (3, 3, cin, feat_dim), jnp.float32),
        # bottleneck Linear(feat_dim -> bottleneck_dim), stored transposed
        "wb": 0.1 * jax.random.normal(ks[1], (feat_dim, bottleneck_dim), jnp.float32),
        "bb": 0.01 * jax.random.normal(ks[2], (1, bottleneck_dim), jnp.float32),
        # BatchNorm1d(bottleneck_dim) eval-mode params / running stats
        "gamma": jnp.ones((1, bottleneck_dim), jnp.float32),
        "beta": jnp.zeros((1, bottleneck_dim), jnp.float32),
        "bn_mean": 0.05 * jax.random.normal(ks[3], (1, bottleneck_dim), jnp.float32),
        "bn_var": jnp.abs(jax.random.normal(ks[4], (1, bottleneck_dim), jnp.float32)) + 0.5,
        # weight_norm fc: v (transposed to (D, C)), g per output class, bias
        "v": 0.1 * jax.random.normal(ks[5], (bottleneck_dim, num_classes), jnp.float32),
        "g": 1.0 + 0.1 * jax.random.normal(ks[6], (1, num_classes), jnp.float32),
        "bfc": 0.01 * jax.random.normal(ks[7], (1, num_classes), jnp.float32),
    }


# Pure-JAX f32 reference for a correctness check of the Pallas path.
def reference_forward(x_nchw, p):
    hp = jax.lax.Precision.HIGHEST
    x = jnp.transpose(x_nchw, (0, 2, 3, 1)).astype(jnp.float32)
    n, h, w, _ = x.shape
    xp = jnp.pad(x, ((0, 0), (1, 1), (1, 1), (0, 0)))
    acc = jnp.zeros((n, h, w, p["conv_w"].shape[-1]), jnp.float32)
    for kh in range(3):
        for kw in range(3):
            acc = acc + jnp.einsum("nhwi,io->nhwo",
                                   xp[:, kh:kh + h, kw:kw + w, :],
                                   p["conv_w"][kh, kw], precision=hp)
    feat = jnp.maximum(acc, 0.0).mean(axis=(1, 2))
    hb = jnp.maximum(jnp.dot(feat, p["wb"], precision=hp) + p["bb"], 0.0)
    hb = (hb - p["bn_mean"]) * jax.lax.rsqrt(p["bn_var"] + 1e-5) * p["gamma"] + p["beta"]
    v = p["v"]
    w_fc = v * (p["g"] / jnp.sqrt(jnp.sum(v * v, axis=0, keepdims=True)))
    return jnp.dot(hb, w_fc, precision=hp) + p["bfc"]


if __name__ == "__main__":
    key = jax.random.PRNGKey(0)
    kx, kp = jax.random.split(key)

    # Small shapes consistent with the module: batch=2, channels=4, spatial=16.
    x = jax.random.normal(kx, (2, 4, 16, 16), jnp.float32)
    params = init_params(kp)

    # One-time parameter prep (out of the per-call hot path).
    prepped = prepare_params(params, x.shape)

    logits = classifier_forward(x, prepped, num_classes=10)
    jax.block_until_ready(logits)

    ref = reference_forward(x, params)
    assert logits.shape == (2, 10)
    # bf16 matmul operands (f32 accumulation) vs an f32 HIGHEST reference.
    assert jnp.allclose(logits, ref, atol=3e-2, rtol=3e-2), "mismatch vs JAX reference"

    print("KERNEL_OK")
</pallas_src>

<mosaic_0001>
module attributes {stable_mosaic.version = 11 : i64} {
  func.func @classifier_kernel(%arg0: memref<512x36xbf16, #tpu.memory_space<vmem>>, %arg1: memref<36x128xbf16, #tpu.memory_space<vmem>>, %arg2: memref<8x512xbf16, #tpu.memory_space<vmem>>, %arg3: memref<128x128xbf16, #tpu.memory_space<vmem>>, %arg4: memref<128x128xbf16, #tpu.memory_space<vmem>>, %arg5: memref<8x128xf32, #tpu.memory_space<vmem>>, %arg6: memref<8x128xf32, #tpu.memory_space<vmem>>) attributes {dimension_semantics = [], scalar_prefetch = 0 : i64, scratch_operands = 0 : i64, tpu.core_type = #tpu.core_type<tc>} {
    %c0 = arith.constant 0 : index
    %c0_0 = arith.constant 0 : index
    %0 = vector.load %arg5[%c0, %c0_0] : memref<8x128xf32, #tpu.memory_space<vmem>>, vector<8x128xf32>
    %c0_1 = arith.constant 0 : index
    %c0_2 = arith.constant 0 : index
    %1 = vector.load %arg0[%c0_1, %c0_2] : memref<512x36xbf16, #tpu.memory_space<vmem>>, vector<512x36xbf16>
    %c0_3 = arith.constant 0 : index
    %c0_4 = arith.constant 0 : index
    %2 = vector.load %arg1[%c0_3, %c0_4] : memref<36x128xbf16, #tpu.memory_space<vmem>>, vector<36x128xbf16>
    %cst = arith.constant dense<0.000000e+00> : vector<512x128xf32>
    %3 = tpu.matmul %1, %2, %cst {dimension_numbers = #tpu.dot_dimension_numbers<[1], [0], [0], [1], [0, 0, 1, 1], [], []>} : vector<512x36xbf16>, vector<36x128xbf16>, vector<512x128xf32> -> vector<512x128xf32>
    %cst_5 = arith.constant 0.000000e+00 : f32
    %4 = vector.broadcast %cst_5 : f32 to vector<512x128xf32>
    %5 = arith.maximumf %3, %4 : vector<512x128xf32>
    %c0_6 = arith.constant 0 : index
    %c0_7 = arith.constant 0 : index
    %6 = vector.load %arg2[%c0_6, %c0_7] : memref<8x512xbf16, #tpu.memory_space<vmem>>, vector<8x512xbf16>
    %7 = arith.truncf %5 : vector<512x128xf32> to vector<512x128xbf16>
    %cst_8 = arith.constant dense<0.000000e+00> : vector<8x128xf32>
    %8 = tpu.matmul %6, %7, %cst_8 {dimension_numbers = #tpu.dot_dimension_numbers<[1], [0], [0], [1], [0, 0, 1, 1], [], []>} : vector<8x512xbf16>, vector<512x128xbf16>, vector<8x128xf32> -> vector<8x128xf32>
    %9 = arith.truncf %8 : vector<8x128xf32> to vector<8x128xbf16>
    %c0_9 = arith.constant 0 : index
    %c0_10 = arith.constant 0 : index
    %10 = vector.load %arg3[%c0_9, %c0_10] : memref<128x128xbf16, #tpu.memory_space<vmem>>, vector<128x128xbf16>
    %cst_11 = arith.constant dense<0.000000e+00> : vector<8x128xf32>
    %11 = tpu.matmul %9, %10, %cst_11 {dimension_numbers = #tpu.dot_dimension_numbers<[1], [0], [0], [1], [0, 0, 1, 1], [], []>} : vector<8x128xbf16>, vector<128x128xbf16>, vector<8x128xf32> -> vector<8x128xf32>
    %12 = vector.extract_strided_slice %0 {offsets = [0, 0], sizes = [1, 128], strides = [1, 1]} : vector<8x128xf32> to vector<1x128xf32>
    %13 = vector.broadcast %12 : vector<1x128xf32> to vector<8x128xf32>
    %14 = arith.addf %11, %13 : vector<8x128xf32>
    %cst_12 = arith.constant 0.000000e+00 : f32
    %15 = vector.broadcast %cst_12 : f32 to vector<8x128xf32>
    %16 = arith.maximumf %14, %15 : vector<8x128xf32>
    %17 = arith.truncf %16 : vector<8x128xf32> to vector<8x128xbf16>
    %c0_13 = arith.constant 0 : index
    %c0_14 = arith.constant 0 : index
    %18 = vector.load %arg4[%c0_13, %c0_14] : memref<128x128xbf16, #tpu.memory_space<vmem>>, vector<128x128xbf16>
    %cst_15 = arith.constant dense<0.000000e+00> : vector<8x128xf32>
    %19 = tpu.matmul %17, %18, %cst_15 {dimension_numbers = #tpu.dot_dimension_numbers<[1], [0], [0], [1], [0, 0, 1, 1], [], []>} : vector<8x128xbf16>, vector<128x128xbf16>, vector<8x128xf32> -> vector<8x128xf32>
    %20 = vector.extract_strided_slice %0 {offsets = [1, 0], sizes = [1, 128], strides = [1, 1]} : vector<8x128xf32> to vector<1x128xf32>
    %21 = vector.broadcast %20 : vector<1x128xf32> to vector<8x128xf32>
    %22 = arith.addf %19, %21 : vector<8x128xf32>
    %c0_16 = arith.constant 0 : index
    %c0_17 = arith.constant 0 : index
    %23 = vector.load %arg6[%c0_16, %c0_17] : memref<8x128xf32, #tpu.memory_space<vmem>>, vector<8x128xf32>
    tpu.vector_store %arg6[%c0_16, %c0_17], %22 {strides = array<i32>} : memref<8x128xf32, #tpu.memory_space<vmem>>, vector<8x128xf32>,
    return
  }
}

</mosaic_0001>

<llo_original>
// kernel: classifier_forward.1
$region0: #{classifier_forward.1}
  #allocation0 [shape = 'u32[]', space=smem, size = 0x4, offset = 0x4, fixed_abs, tag = 'smem constant byte address 0x4 - core index']
  #allocation1 [shape = 'u32[144,128]{1,0:T(1,128)}', space=vmem, size = 0x12000, scoped, tag = 'internal scratch']
  %s0 = inlined_call_operand.vmem [shape: bf16[512,36], index: 0, kind: input, shape index: {}]
  %s1 = inlined_call_operand.vmem [shape: bf16[36,128], index: 1, kind: input, shape index: {}]
  %s2 = inlined_call_operand.vmem [shape: bf16[8,512], index: 2, kind: input, shape index: {}]
  %s3 = inlined_call_operand.vmem [shape: bf16[128,128], index: 3, kind: input, shape index: {}]
  %s4 = inlined_call_operand.vmem [shape: bf16[128,128], index: 4, kind: input, shape index: {}]
  %s5 = inlined_call_operand.vmem [shape: f32[8,128], index: 5, kind: input, shape index: {}]
  %s6 = inlined_call_operand.vmem [shape: f32[8,128], index: 6, kind: output, shape index: {}]
  %s7 = sld [smem:[#allocation0]]
  $region34: #{classifier_forward.1} parent=0
    _
  %s9 = ssub.s32 1, %s7
  %s10 = scalar_select 0, %s9, %s7
  // Predicated region
  $region2: #{classifier_forward.1} parent=0 // pred_check
    _
  $region3: #{classifier_forward.1} parent=0 // pred_check_branch
    %12 = sbr.rel (0) target = $region5
  $region4: #{classifier_forward.1} parent=0 // pred_region
    _
  $region5: #{classifier_forward.1} parent=0 // pred_fallthru
    _
  // Predicated region
  $region6: #{classifier_forward.1} parent=0 // pred_check
    _
  $region7: #{classifier_forward.1} parent=0 // pred_check_branch
    %14 = sbr.rel (0) target = $region9
  $region8: #{classifier_forward.1} parent=0 // pred_region
    _
  $region9: #{classifier_forward.1} parent=0 // pred_fallthru
    _
  // Predicated region
  $region10: #{classifier_forward.1} parent=0 // pred_check
    _
  $region11: #{classifier_forward.1} parent=0 // pred_check_branch
    %16 = sbr.rel (0) target = $region13
  $region12: #{classifier_forward.1} parent=0 // pred_region
    _
  $region13: #{classifier_forward.1} parent=0 // pred_fallthru
    _
  // Predicated region
  $region14: #{classifier_forward.1} parent=0 // pred_check
    _
  $region15: #{classifier_forward.1} parent=0 // pred_check_branch
    %18 = sbr.rel (0) target = $region17
  $region16: #{classifier_forward.1} parent=0 // pred_region
    _
  $region17: #{classifier_forward.1} parent=0 // pred_fallthru
    _
  // Predicated region
  $region18: #{classifier_forward.1} parent=0 // pred_check
    _
  $region19: #{classifier_forward.1} parent=0 // pred_check_branch
    %20 = sbr.rel (0) target = $region21
  $region20: #{classifier_forward.1} parent=0 // pred_region
    _
  $region21: #{classifier_forward.1} parent=0 // pred_fallthru
    _
  // Predicated region
  $region22: #{classifier_forward.1} parent=0 // pred_check
    _
  $region23: #{classifier_forward.1} parent=0 // pred_check_branch
    %22 = sbr.rel (0) target = $region25
  $region24: #{classifier_forward.1} parent=0 // pred_region
    _
  $region25: #{classifier_forward.1} parent=0 // pred_fallthru
    _
  %v24 = vld [vmem:[%s5] sm:$0xff]
  %v25 = vld [vmem:[%s0] sm:$0xf]
  %v26 = vld [vmem:[%s0 + $0x4] sm:$0xf]
  %v27 = vld [vmem:[%s0 + $0x8] sm:$0xf]
  %v28 = vld [vmem:[%s0 + $0xc] sm:$0xf]
  %v29 = vld [vmem:[%s0 + $0x10] sm:$0xf]
  %v30 = vld [vmem:[%s0 + $0x14] sm:$0xf]
  %v31 = vld [vmem:[%s0 + $0x18] sm:$0xf]
  %v32 = vld [vmem:[%s0 + $0x1c] sm:$0xf]
  %v33 = vld [vmem:[%s0 + $0x20] sm:$0xf]
  %v34 = vld [vmem:[%s0 + $0x24] sm:$0xf]
  %v35 = vld [vmem:[%s0 + $0x28] sm:$0xf]
  %v36 = vld [vmem:[%s0 + $0x2c] sm:$0xf]
  %v37 = vld [vmem:[%s0 + $0x30] sm:$0xf]
  %v38 = vld [vmem:[%s0 + $0x34] sm:$0xf]
  %v39 = vld [vmem:[%s0 + $0x38] sm:$0xf]
  %v40 = vld [vmem:[%s0 + $0x3c] sm:$0xf]
  %v41 = vld [vmem:[%s0 + $0x40] sm:$0xf]
  %v42 = vld [vmem:[%s0 + $0x44] sm:$0xf]
  %v43 = vld [vmem:[%s0 + $0x48] sm:$0xf]
  %v44 = vld [vmem:[%s0 + $0x4c] sm:$0xf]
  %v45 = vld [vmem:[%s0 + $0x50] sm:$0xf]
  %v46 = vld [vmem:[%s0 + $0x54] sm:$0xf]
  %v47 = vld [vmem:[%s0 + $0x58] sm:$0xf]
  %v48 = vld [vmem:[%s0 + $0x5c] sm:$0xf]
  %v49 = vld [vmem:[%s0 + $0x60] sm:$0xf]
  %v50 = vld [vmem:[%s0 + $0x64] sm:$0xf]
  %v51 = vld [vmem:[%s0 + $0x68] sm:$0xf]
  %v52 = vld [vmem:[%s0 + $0x6c] sm:$0xf]
  %v53 = vld [vmem:[%s0 + $0x70] sm:$0xf]
  %v54 = vld [vmem:[%s0 + $0x74] sm:$0xf]
  %v55 = vld [vmem:[%s0 + $0x78] sm:$0xf]
  %v56 = vld [vmem:[%s0 + $0x7c] sm:$0xf]
  %v57 = vld [vmem:[%s0 + $0x80] sm:$0xf]
  %v58 = vld [vmem:[%s0 + $0x84] sm:$0xf]
  %v59 = vld [vmem:[%s0 + $0x88] sm:$0xf]
  %v60 = vld [vmem:[%s0 + $0x8c] sm:$0xf]
  %v61 = vld [vmem:[%s0 + $0x90] sm:$0xf]
  %v62 = vld [vmem:[%s0 + $0x94] sm:$0xf]
  %v63 = vld [vmem:[%s0 + $0x98] sm:$0xf]
  %v64 = vld [vmem:[%s0 + $0x9c] sm:$0xf]
  %v65 = vld [vmem:[%s0 + $0xa0] sm:$0xf]
  %v66 = vld [vmem:[%s0 + $0xa4] sm:$0xf]
  %v67 = vld [vmem:[%s0 + $0xa8] sm:$0xf]
  %v68 = vld [vmem:[%s0 + $0xac] sm:$0xf]
  %v69 = vld [vmem:[%s0 + $0xb0] sm:$0xf]
  %v70 = vld [vmem:[%s0 + $0xb4] sm:$0xf]
  %v71 = vld [vmem:[%s0 + $0xb8] sm:$0xf]
  %v72 = vld [vmem:[%s0 + $0xbc] sm:$0xf]
  %v73 = vld [vmem:[%s0 + $0xc0] sm:$0xf]
  %v74 = vld [vmem:[%s0 + $0xc4] sm:$0xf]
  %v75 = vld [vmem:[%s0 + $0xc8] sm:$0xf]
  %v76 = vld [vmem:[%s0 + $0xcc] sm:$0xf]
  %v77 = vld [vmem:[%s0 + $0xd0] sm:$0xf]
  %v78 = vld [vmem:[%s0 + $0xd4] sm:$0xf]
  %v79 = vld [vmem:[%s0 + $0xd8] sm:$0xf]
  %v80 = vld [vmem:[%s0 + $0xdc] sm:$0xf]
  %v81 = vld [vmem:[%s0 + $0xe0] sm:$0xf]
  %v82 = vld [vmem:[%s0 + $0xe4] sm:$0xf]
  %v83 = vld [vmem:[%s0 + $0xe8] sm:$0xf]
  %v84 = vld [vmem:[%s0 + $0xec] sm:$0xf]
  %v85 = vld [vmem:[%s0 + $0xf0] sm:$0xf]
  %v86 = vld [vmem:[%s0 + $0xf4] sm:$0xf]
  %v87 = vld [vmem:[%s0 + $0xf8] sm:$0xf]
  %v88 = vld [vmem:[%s0 + $0xfc] sm:$0xf]
  %v89 = vld [vmem:[%s1] sm:$0xf]
  %v90 = vld [vmem:[%s1 + $0x4] sm:$0xf]
  %v91 = vld [vmem:[%s1 + $0x8] sm:$0xf]
  %v92 = vld [vmem:[%s1 + $0xc] sm:$0xf]
  %v93 = vld [vmem:[%s1 + $0x10] sm:$0x3]
  %v158 = vunpack.c.l.b16 %v25
  %v159 = vunpack.c.l.b16 %v26
  %v160 = vunpack.c.l.b16 %v27
  %v161 = vunpack.c.l.b16 %v28
  %v162 = vunpack.c.l.b16 %v29
  %v163 = vunpack.c.l.b16 %v30
  %v164 = vunpack.c.l.b16 %v31
  %v165 = vunpack.c.l.b16 %v32
  %v166 = vunpack.c.l.b16 %v33
  %v167 = vunpack.c.l.b16 %v34
  %v168 = vunpack.c.l.b16 %v35
  %v169 = vunpack.c.l.b16 %v36
  %v170 = vunpack.c.l.b16 %v37
  %v171 = vunpack.c.l.b16 %v38
  %v172 = vunpack.c.l.b16 %v39
  %v173 = vunpack.c.l.b16 %v40
  %v174 = vunpack.c.l.b16 %v41
  %v175 = vunpack.c.l.b16 %v42
  %v176 = vunpack.c.l.b16 %v43
  %v177 = vunpack.c.l.b16 %v44
  %v178 = vunpack.c.l.b16 %v45
  %v179 = vunpack.c.l.b16 %v46
  %v180 = vunpack.c.l.b16 %v47
  %v181 = vunpack.c.l.b16 %v48
  %v182 = vunpack.c.l.b16 %v49
  %v183 = vunpack.c.l.b16 %v50
  %v184 = vunpack.c.l.b16 %v51
  %v185 = vunpack.c.l.b16 %v52
  %v186 = vunpack.c.l.b16 %v53
  %v187 = vunpack.c.l.b16 %v54
  %v188 = vunpack.c.l.b16 %v55
  %v189 = vunpack.c.l.b16 %v56
  %v190 = vunpack.c.l.b16 %v57
  %v191 = vunpack.c.l.b16 %v58
  %v192 = vunpack.c.l.b16 %v59
  %v193 = vunpack.c.l.b16 %v60
  %v194 = vunpack.c.l.b16 %v61
  %v195 = vunpack.c.l.b16 %v62
  %v196 = vunpack.c.l.b16 %v63
  %v197 = vunpack.c.l.b16 %v64
  %v198 = vunpack.c.l.b16 %v65
  %v199 = vunpack.c.l.b16 %v66
  %v200 = vunpack.c.l.b16 %v67
  %v201 = vunpack.c.l.b16 %v68
  %v202 = vunpack.c.l.b16 %v69
  %v203 = vunpack.c.l.b16 %v70
  %v204 = vunpack.c.l.b16 %v71
  %v205 = vunpack.c.l.b16 %v72
  %v206 = vunpack.c.l.b16 %v73
  %v207 = vunpack.c.l.b16 %v74
  %v208 = vunpack.c.l.b16 %v75
  %v209 = vunpack.c.l.b16 %v76
  %v210 = vunpack.c.l.b16 %v77
  %v211 = vunpack.c.l.b16 %v78
  %v212 = vunpack.c.l.b16 %v79
  %v213 = vunpack.c.l.b16 %v80
  %v214 = vunpack.c.l.b16 %v81
  %v215 = vunpack.c.l.b16 %v82
  %v216 = vunpack.c.l.b16 %v83
  %v217 = vunpack.c.l.b16 %v84
  %v218 = vunpack.c.l.b16 %v85
  %v219 = vunpack.c.l.b16 %v86
  %v220 = vunpack.c.l.b16 %v87
  %v221 = vunpack.c.l.b16 %v88
  %v222 = vpack.c.b16 %v159, %v158
  %v223 = vpack.c.b16 %v161, %v160
  %v224 = vpack.c.b16 %v163, %v162
  %v225 = vpack.c.b16 %v165, %v164
  %v226 = vpack.c.b16 %v167, %v166
  %v227 = vpack.c.b16 %v169, %v168
  %v228 = vpack.c.b16 %v171, %v170
  %v229 = vpack.c.b16 %v173, %v172
  %v230 = vpack.c.b16 %v175, %v174
  %v231 = vpack.c.b16 %v177, %v176
  %v232 = vpack.c.b16 %v179, %v178
  %v233 = vpack.c.b16 %v181, %v180
  %v234 = vpack.c.b16 %v183, %v182
  %v235 = vpack.c.b16 %v185, %v184
  %v236 = vpack.c.b16 %v187, %v186
  %v237 = vpack.c.b16 %v189, %v188
  %v238 = vpack.c.b16 %v191, %v190
  %v239 = vpack.c.b16 %v193, %v192
  %v240 = vpack.c.b16 %v195, %v194
  %v241 = vpack.c.b16 %v197, %v196
  %v242 = vpack.c.b16 %v199, %v198
  %v243 = vpack.c.b16 %v201, %v200
  %v244 = vpack.c.b16 %v203, %v202
  %v245 = vpack.c.b16 %v205, %v204
  %v246 = vpack.c.b16 %v207, %v206
  %v247 = vpack.c.b16 %v209, %v208
  %v248 = vpack.c.b16 %v211, %v210
  %v249 = vpack.c.b16 %v213, %v212
  %v250 = vpack.c.b16 %v215, %v214
  %v251 = vpack.c.b16 %v217, %v216
  %v252 = vpack.c.b16 %v219, %v218
  %v253 = vpack.c.b16 %v221, %v220
  %v259 = vunpack.c.l.b16 %v89
  %v260 = vunpack.c.l.b16 %v90
  %v261 = vunpack.c.l.b16 %v91
  %v262 = vunpack.c.l.b16 %v92
  %v263 = vunpack.c.l.b16 %v93
  %v264 = vpack.c.b16 %v260, %v259
  %v265 = vpack.c.b16 %v262, %v261
  %v266 = vpack.c.b16 %v263, %v263
  %vm269 = vcmask 293888
  %v271 = vsel %vm269, %v222, 0
  %v274 = vsel %vm269, %v223, 0
  %v277 = vsel %vm269, %v224, 0
  %v280 = vsel %vm269, %v225, 0
  %v283 = vsel %vm269, %v226, 0
  %v286 = vsel %vm269, %v227, 0
  %v289 = vsel %vm269, %v228, 0
  %v292 = vsel %vm269, %v229, 0
  %v295 = vsel %vm269, %v230, 0
  %v298 = vsel %vm269, %v231, 0
  %v301 = vsel %vm269, %v232, 0
  %v304 = vsel %vm269, %v233, 0
  %v307 = vsel %vm269, %v234, 0
  %v310 = vsel %vm269, %v235, 0
  %v313 = vsel %vm269, %v236, 0
  %v316 = vsel %vm269, %v237, 0
  %v319 = vsel %vm269, %v238, 0
  %v322 = vsel %vm269, %v239, 0
  %v325 = vsel %vm269, %v240, 0
  %v328 = vsel %vm269, %v241, 0
  %v331 = vsel %vm269, %v242, 0
  %v334 = vsel %vm269, %v243, 0
  %v337 = vsel %vm269, %v244, 0
  %v340 = vsel %vm269, %v245, 0
  %v343 = vsel %vm269, %v246, 0
  %v346 = vsel %vm269, %v247, 0
  %v349 = vsel %vm269, %v248, 0
  %v352 = vsel %vm269, %v249, 0
  %v355 = vsel %vm269, %v250, 0
  %v358 = vsel %vm269, %v251, 0
  %v361 = vsel %vm269, %v252, 0
  %v364 = vsel %vm269, %v253, 0
  %vm366 = vcmask 1041408
  %v368 = vsel %vm366, %v266, 0
  %370 = vmatprep.subr.bf16.mxu0 0
  %371 = vmatpush1.bf16.msra.mxu0 0
  %372 = vmatprep.subr.bf16.mxu0 0
  %373 = vmatpush1.bf16.msra.mxu0 0
  %374 = vmatprep.subr.bf16.mxu0 0
  %375 = vmatpush1.bf16.msra.mxu0 0
  %376 = vmatprep.subr.bf16.mxu0 0
  %377 = vmatpush1.bf16.msra.mxu0 0
  %378 = vmatprep.subr.bf16.mxu0 0
  %379 = vmatpush1.bf16.msra.mxu0 0
  %380 = vmatprep.subr.bf16.mxu0 0
  %381 = vmatpush1.bf16.msra.mxu0 %v368
  %382 = vmatprep.subr.bf16.mxu0 0
  %383 = vmatpush1.bf16.msra.mxu0 %v265
  %384 = vmatprep.subr.bf16.mxu0 0
  %385 = vmatpush1.bf16.msra.mxu0 %v264
  %386 = vmatprep.subr.bf16.mxu0 0
  %387 = vmatpush2.bf16.msra.mxu0 0
  %388 = vmatprep.subr.bf16.mxu0 0
  %389 = vmatpush2.bf16.msra.mxu0 0
  %390 = vmatprep.subr.bf16.mxu0 0
  %391 = vmatpush2.bf16.msra.mxu0 0
  %392 = vmatprep.subr.bf16.mxu0 0
  %393 = vmatpush2.bf16.msra.mxu0 0
  %394 = vmatprep.subr.bf16.mxu0 0
  %395 = vmatpush2.bf16.msra.mxu0 0
  %396 = vmatprep.subr.bf16.mxu0 0
  %397 = vmatpush2.bf16.msra.mxu0 0
  %398 = vmatprep.subr.bf16.mxu0 0
  %399 = vmatpush2.bf16.msra.mxu0 0
  %400 = vmatprep.subr.bf16.mxu0 0
  %401 = vmatpush2.bf16.msra.mxu0 0
  %402 = vmatprep.mubr.bf16.mxu0 0
  %403 = vmatmul.mubr.bf16.gmra.mxu0 %v271
  %v404 = vpop.f32.mrf.mxu0
  %v405 = vadd.f32 0.0, %v404
  %v406 = vpop.f32.mrf.mxu0
  %v407 = vpop.f32.mrf.mxu0
  %v408 = vadd.f32 0.0, %v407
  %v409 = vpop.f32.mrf.mxu0
  %410 = vmatprep.mubr.bf16.mxu0 0
  %411 = vmatmul.mubr.bf16.gmra.mxu0 %v274
  %v412 = vpop.f32.mrf.mxu0
  %v413 = vadd.f32 0.0, %v412
  %v414 = vpop.f32.mrf.mxu0
  %v415 = vpop.f32.mrf.mxu0
  %v416 = vadd.f32 0.0, %v415
  %v417 = vpop.f32.mrf.mxu0
  %418 = vmatprep.mubr.bf16.mxu0 0
  %419 = vmatmul.mubr.bf16.gmra.mxu0 %v277
  %v420 = vpop.f32.mrf.mxu0
  %v421 = vadd.f32 0.0, %v420
  %v422 = vpop.f32.mrf.mxu0
  %v423 = vpop.f32.mrf.mxu0
  %v424 = vadd.f32 0.0, %v423
  %v425 = vpop.f32.mrf.mxu0
  %426 = vmatprep.mubr.bf16.mxu0 0
  %427 = vmatmul.mubr.bf16.gmra.mxu0 %v280
  %v428 = vpop.f32.mrf.mxu0
  %v429 = vadd.f32 0.0, %v428
  %v430 = vpop.f32.mrf.mxu0
  %v431 = vpop.f32.mrf.mxu0
  %v432 = vadd.f32 0.0, %v431
  %v433 = vpop.f32.mrf.mxu0
  %434 = vmatprep.mubr.bf16.mxu0 0
  %435 = vmatmul.mubr.bf16.gmra.mxu0 %v283
  %v436 = vpop.f32.mrf.mxu0
  %v437 = vadd.f32 0.0, %v436
  %v438 = vpop.f32.mrf.mxu0
  %v439 = vpop.f32.mrf.mxu0
  %v440 = vadd.f32 0.0, %v439
  %v441 = vpop.f32.mrf.mxu0
  %442 = vmatprep.mubr.bf16.mxu0 0
  %443 = vmatmul.mubr.bf16.gmra.mxu0 %v286
  %v444 = vpop.f32.mrf.mxu0
  %v445 = vadd.f32 0.0, %v444
  %v446 = vpop.f32.mrf.mxu0
  %v447 = vpop.f32.mrf.mxu0
  %v448 = vadd.f32 0.0, %v447
  %v449 = vpop.f32.mrf.mxu0
  %450 = vmatprep.mubr.bf16.mxu0 0
  %451 = vmatmul.mubr.bf16.gmra.mxu0 %v289
  %v452 = vpop.f32.mrf.mxu0
  %v453 = vadd.f32 0.0, %v452
  %v454 = vpop.f32.mrf.mxu0
  %v455 = vpop.f32.mrf.mxu0
  %v456 = vadd.f32 0.0, %v455
  %v457 = vpop.f32.mrf.mxu0
  %458 = vmatprep.mubr.bf16.mxu0 0
  %459 = vmatmul.mubr.bf16.gmra.mxu0 %v292
  %v460 = vpop.f32.mrf.mxu0
  %v461 = vadd.f32 0.0, %v460
  %v462 = vpop.f32.mrf.mxu0
  %v463 = vpop.f32.mrf.mxu0
  %v464 = vadd.f32 0.0, %v463
  %v465 = vpop.f32.mrf.mxu0
  %466 = vmatprep.mubr.bf16.mxu0 0
  %467 = vmatmul.mubr.bf16.gmra.mxu0 %v295
  %v468 = vpop.f32.mrf.mxu0
  %v469 = vadd.f32 0.0, %v468
  %v470 = vpop.f32.mrf.mxu0
  %v471 = vpop.f32.mrf.mxu0
  %v472 = vadd.f32 0.0, %v471
  %v473 = vpop.f32.mrf.mxu0
  %474 = vmatprep.mubr.bf16.mxu0 0
  %475 = vmatmul.mubr.bf16.gmra.mxu0 %v298
  %v476 = vpop.f32.mrf.mxu0
  %v477 = vadd.f32 0.0, %v476
  %v478 = vpop.f32.mrf.mxu0
  %v479 = vpop.f32.mrf.mxu0
  %v480 = vadd.f32 0.0, %v479
  %v481 = vpop.f32.mrf.mxu0
  %482 = vmatprep.mubr.bf16.mxu0 0
  %483 = vmatmul.mubr.bf16.gmra.mxu0 %v301
  %v484 = vpop.f32.mrf.mxu0
  %v485 = vadd.f32 0.0, %v484
  %v486 = vpop.f32.mrf.mxu0
  %v487 = vpop.f32.mrf.mxu0
  %v488 = vadd.f32 0.0, %v487
  %v489 = vpop.f32.mrf.mxu0
  %490 = vmatprep.mubr.bf16.mxu0 0
  %491 = vmatmul.mubr.bf16.gmra.mxu0 %v304
  %v492 = vpop.f32.mrf.mxu0
  %v493 = vadd.f32 0.0, %v492
  %v494 = vpop.f32.mrf.mxu0
  %v495 = vpop.f32.mrf.mxu0
  %v496 = vadd.f32 0.0, %v495
  %v497 = vpop.f32.mrf.mxu0
  %498 = vmatprep.mubr.bf16.mxu0 0
  %499 = vmatmul.mubr.bf16.gmra.mxu0 %v307
  %v500 = vpop.f32.mrf.mxu0
  %v501 = vadd.f32 0.0, %v500
  %v502 = vpop.f32.mrf.mxu0
  %v503 = vpop.f32.mrf.mxu0
  %v504 = vadd.f32 0.0, %v503
  %v505 = vpop.f32.mrf.mxu0
  %506 = vmatprep.mubr.bf16.mxu0 0
  %507 = vmatmul.mubr.bf16.gmra.mxu0 %v310
  %v508 = vpop.f32.mrf.mxu0
  %v509 = vadd.f32 0.0, %v508
  %v510 = vpop.f32.mrf.mxu0
  %v511 = vpop.f32.mrf.mxu0
  %v512 = vadd.f32 0.0, %v511
  %v513 = vpop.f32.mrf.mxu0
  %514 = vmatprep.mubr.bf16.mxu0 0
  %515 = vmatmul.mubr.bf16.gmra.mxu0 %v313
  %v516 = vpop.f32.mrf.mxu0
  %v517 = vadd.f32 0.0, %v516
  %v518 = vpop.f32.mrf.mxu0
  %v519 = vpop.f32.mrf.mxu0
  %v520 = vadd.f32 0.0, %v519
  %v521 = vpop.f32.mrf.mxu0
  %522 = vmatprep.mubr.bf16.mxu0 0
  %523 = vmatmul.mubr.bf16.gmra.mxu0 %v316
  %v524 = vpop.f32.mrf.mxu0
  %v525 = vadd.f32 0.0, %v524
  %v526 = vpop.f32.mrf.mxu0
  %v527 = vpop.f32.mrf.mxu0
  %v528 = vadd.f32 0.0, %v527
  %v529 = vpop.f32.mrf.mxu0
  %530 = vmatprep.mubr.bf16.mxu0 0
  %531 = vmatmul.mubr.bf16.gmra.mxu0 %v319
  %v532 = vpop.f32.mrf.mxu0
  %v533 = vadd.f32 0.0, %v532
  %v534 = vpop.f32.mrf.mxu0
  %v535 = vpop.f32.mrf.mxu0
  %v536 = vadd.f32 0.0, %v535
  %v537 = vpop.f32.mrf.mxu0
  %538 = vmatprep.mubr.bf16.mxu0 0
  %539 = vmatmul.mubr.bf16.gmra.mxu0 %v322
  %v540 = vpop.f32.mrf.mxu0
  %v541 = vadd.f32 0.0, %v540
  %v542 = vpop.f32.mrf.mxu0
  %v543 = vpop.f32.mrf.mxu0
  %v544 = vadd.f32 0.0, %v543
  %v545 = vpop.f32.mrf.mxu0
  %546 = vmatprep.mubr.bf16.mxu0 0
  %547 = vmatmul.mubr.bf16.gmra.mxu0 %v325
  %v548 = vpop.f32.mrf.mxu0
  %v549 = vadd.f32 0.0, %v548
  %v550 = vpop.f32.mrf.mxu0
  %v551 = vpop.f32.mrf.mxu0
  %v552 = vadd.f32 0.0, %v551
  %v553 = vpop.f32.mrf.mxu0
  %554 = vmatprep.mubr.bf16.mxu0 0
  %555 = vmatmul.mubr.bf16.gmra.mxu0 %v328
  %v556 = vpop.f32.mrf.mxu0
  %v557 = vadd.f32 0.0, %v556
  %v558 = vpop.f32.mrf.mxu0
  %v559 = vpop.f32.mrf.mxu0
  %v560 = vadd.f32 0.0, %v559
  %v561 = vpop.f32.mrf.mxu0
  %562 = vmatprep.mubr.bf16.mxu0 0
  %563 = vmatmul.mubr.bf16.gmra.mxu0 %v331
  %v564 = vpop.f32.mrf.mxu0
  %v565 = vadd.f32 0.0, %v564
  %v566 = vpop.f32.mrf.mxu0
  %v567 = vpop.f32.mrf.mxu0
  %v568 = vadd.f32 0.0, %v567
  %v569 = vpop.f32.mrf.mxu0
  %570 = vmatprep.mubr.bf16.mxu0 0
  %571 = vmatmul.mubr.bf16.gmra.mxu0 %v334
  %v572 = vpop.f32.mrf.mxu0
  %v573 = vadd.f32 0.0, %v572
  %v574 = vpop.f32.mrf.mxu0
  %v575 = vpop.f32.mrf.mxu0
  %v576 = vadd.f32 0.0, %v575
  %v577 = vpop.f32.mrf.mxu0
  %578 = vmatprep.mubr.bf16.mxu0 0
  %579 = vmatmul.mubr.bf16.gmra.mxu0 %v337
  %v580 = vpop.f32.mrf.mxu0
  %v581 = vadd.f32 0.0, %v580
  %v582 = vpop.f32.mrf.mxu0
  %v583 = vpop.f32.mrf.mxu0
  %v584 = vadd.f32 0.0, %v583
  %v585 = vpop.f32.mrf.mxu0
  %586 = vmatprep.mubr.bf16.mxu0 0
  %587 = vmatmul.mubr.bf16.gmra.mxu0 %v340
  %v588 = vpop.f32.mrf.mxu0
  %v589 = vadd.f32 0.0, %v588
  %v590 = vpop.f32.mrf.mxu0
  %v591 = vpop.f32.mrf.mxu0
  %v592 = vadd.f32 0.0, %v591
  %v593 = vpop.f32.mrf.mxu0
  %594 = vmatprep.mubr.bf16.mxu0 0
  %595 = vmatmul.mubr.bf16.gmra.mxu0 %v343
  %v596 = vpop.f32.mrf.mxu0
  %v597 = vadd.f32 0.0, %v596
  %v598 = vpop.f32.mrf.mxu0
  %v599 = vpop.f32.mrf.mxu0
  %v600 = vadd.f32 0.0, %v599
  %v601 = vpop.f32.mrf.mxu0
  %602 = vmatprep.mubr.bf16.mxu0 0
  %603 = vmatmul.mubr.bf16.gmra.mxu0 %v346
  %v604 = vpop.f32.mrf.mxu0
  %v605 = vadd.f32 0.0, %v604
  %v606 = vpop.f32.mrf.mxu0
  %v607 = vpop.f32.mrf.mxu0
  %v608 = vadd.f32 0.0, %v607
  %v609 = vpop.f32.mrf.mxu0
  %610 = vmatprep.mubr.bf16.mxu0 0
  %611 = vmatmul.mubr.bf16.gmra.mxu0 %v349
  %v612 = vpop.f32.mrf.mxu0
  %v613 = vadd.f32 0.0, %v612
  %v614 = vpop.f32.mrf.mxu0
  %v615 = vpop.f32.mrf.mxu0
  %v616 = vadd.f32 0.0, %v615
  %v617 = vpop.f32.mrf.mxu0
  %618 = vmatprep.mubr.bf16.mxu0 0
  %619 = vmatmul.mubr.bf16.gmra.mxu0 %v352
  %v620 = vpop.f32.mrf.mxu0
  %v621 = vadd.f32 0.0, %v620
  %v622 = vpop.f32.mrf.mxu0
  %v623 = vpop.f32.mrf.mxu0
  %v624 = vadd.f32 0.0, %v623
  %v625 = vpop.f32.mrf.mxu0
  %626 = vmatprep.mubr.bf16.mxu0 0
  %627 = vmatmul.mubr.bf16.gmra.mxu0 %v355
  %v628 = vpop.f32.mrf.mxu0
  %v629 = vadd.f32 0.0, %v628
  %v630 = vpop.f32.mrf.mxu0
  %v631 = vpop.f32.mrf.mxu0
  %v632 = vadd.f32 0.0, %v631
  %v633 = vpop.f32.mrf.mxu0
  %634 = vmatprep.mubr.bf16.mxu0 0
  %635 = vmatmul.mubr.bf16.gmra.mxu0 %v358
  %v636 = vpop.f32.mrf.mxu0
  %v637 = vadd.f32 0.0, %v636
  %v638 = vpop.f32.mrf.mxu0
  %v639 = vpop.f32.mrf.mxu0
  %v640 = vadd.f32 0.0, %v639
  %v641 = vpop.f32.mrf.mxu0
  %642 = vmatprep.mubr.bf16.mxu0 0
  %643 = vmatmul.mubr.bf16.gmra.mxu0 %v361
  %v644 = vpop.f32.mrf.mxu0
  %v645 = vadd.f32 0.0, %v644
  %v646 = vpop.f32.mrf.mxu0
  %v647 = vpop.f32.mrf.mxu0
  %v648 = vadd.f32 0.0, %v647
  %v649 = vpop.f32.mrf.mxu0
  %650 = vmatprep.mubr.bf16.mxu0 0
  %651 = vmatmul.mubr.bf16.gmra.mxu0 %v364
  %v652 = vpop.f32.mrf.mxu0
  %v653 = vadd.f32 0.0, %v652
  %v654 = vpop.f32.mrf.mxu0
  %v655 = vpop.f32.mrf.mxu0
  %v656 = vadd.f32 0.0, %v655
  %v657 = vpop.f32.mrf.mxu0
  %658 = vdwg.mxu0
  %v659 = vmax.f32 %v405, 0.0
  %v660 = vmax.f32 %v408, 0.0
  %v661 = vmax.f32 %v413, 0.0
  %v662 = vmax.f32 %v416, 0.0
  %v663 = vmax.f32 %v421, 0.0
  %v664 = vmax.f32 %v424, 0.0
  %v665 = vmax.f32 %v429, 0.0
  %v666 = vmax.f32 %v432, 0.0
  %v667 = vmax.f32 %v437, 0.0
  %v668 = vmax.f32 %v440, 0.0
  %v669 = vmax.f32 %v445, 0.0
  %v670 = vmax.f32 %v448, 0.0
  %v671 = vmax.f32 %v453, 0.0
  %v672 = vmax.f32 %v456, 0.0
  %v673 = vmax.f32 %v461, 0.0
  %v674 = vmax.f32 %v464, 0.0
  %v675 = vmax.f32 %v469, 0.0
  %v676 = vmax.f32 %v472, 0.0
  %v677 = vmax.f32 %v477, 0.0
  %v678 = vmax.f32 %v480, 0.0
  %v679 = vmax.f32 %v485, 0.0
  %v680 = vmax.f32 %v488, 0.0
  %v681 = vmax.f32 %v493, 0.0
  %v682 = vmax.f32 %v496, 0.0
  %v683 = vmax.f32 %v501, 0.0
  %v684 = vmax.f32 %v504, 0.0
  %v685 = vmax.f32 %v509, 0.0
  %v686 = vmax.f32 %v512, 0.0
  %v687 = vmax.f32 %v517, 0.0
  %v688 = vmax.f32 %v520, 0.0
  %v689 = vmax.f32 %v525, 0.0
  %v690 = vmax.f32 %v528, 0.0
  %v691 = vmax.f32 %v533, 0.0
  %v692 = vmax.f32 %v536, 0.0
  %v693 = vmax.f32 %v541, 0.0
  %v694 = vmax.f32 %v544, 0.0
  %v695 = vmax.f32 %v549, 0.0
  %v696 = vmax.f32 %v552, 0.0
  %v697 = vmax.f32 %v557, 0.0
  %v698 = vmax.f32 %v560, 0.0
  %v699 = vmax.f32 %v565, 0.0
  %v700 = vmax.f32 %v568, 0.0
  %v701 = vmax.f32 %v573, 0.0
  %v702 = vmax.f32 %v576, 0.0
  %v703 = vmax.f32 %v581, 0.0
  %v704 = vmax.f32 %v584, 0.0
  %v705 = vmax.f32 %v589, 0.0
  %v706 = vmax.f32 %v592, 0.0
  %v707 = vmax.f32 %v597, 0.0
  %v708 = vmax.f32 %v600, 0.0
  %v709 = vmax.f32 %v605, 0.0
  %v710 = vmax.f32 %v608, 0.0
  %v711 = vmax.f32 %v613, 0.0
  %v712 = vmax.f32 %v616, 0.0
  %v713 = vmax.f32 %v621, 0.0
  %v714 = vmax.f32 %v624, 0.0
  %v715 = vmax.f32 %v629, 0.0
  %v716 = vmax.f32 %v632, 0.0
  %v717 = vmax.f32 %v637, 0.0
  %v718 = vmax.f32 %v640, 0.0
  %v719 = vmax.f32 %v645, 0.0
  %v720 = vmax.f32 %v648, 0.0
  %v721 = vmax.f32 %v653, 0.0
  %v722 = vmax.f32 %v656, 0.0
  %v723 = vld [vmem:[%s2] sm:$0xff]
  %v724 = vld [vmem:[%s2 + $0x8] sm:$0xff]
  %v725 = vpack.c.bf16 %v660, %v659
  %v726 = vpack.c.bf16 %v662, %v661
  %v727 = vpack.c.bf16 %v664, %v663
  %v728 = vpack.c.bf16 %v666, %v665
  %v729 = vpack.c.bf16 %v668, %v667
  %v730 = vpack.c.bf16 %v670, %v669
  %v731 = vpack.c.bf16 %v672, %v671
  %v732 = vpack.c.bf16 %v674, %v673
  %v733 = vpack.c.bf16 %v676, %v675
  %v734 = vpack.c.bf16 %v678, %v677
  %v735 = vpack.c.bf16 %v680, %v679
  %v736 = vpack.c.bf16 %v682, %v681
  %v737 = vpack.c.bf16 %v684, %v683
  %v738 = vpack.c.bf16 %v686, %v685
  %v739 = vpack.c.bf16 %v688, %v687
  %v740 = vpack.c.bf16 %v690, %v689
  %v741 = vpack.c.bf16 %v692, %v691
  %v742 = vpack.c.bf16 %v694, %v693
  %v743 = vpack.c.bf16 %v696, %v695
  %v744 = vpack.c.bf16 %v698, %v697
  %v745 = vpack.c.bf16 %v700, %v699
  %v746 = vpack.c.bf16 %v702, %v701
  %v747 = vpack.c.bf16 %v704, %v703
  %v748 = vpack.c.bf16 %v706, %v705
  %v749 = vpack.c.bf16 %v708, %v707
  %v750 = vpack.c.bf16 %v710, %v709
  %v751 = vpack.c.bf16 %v712, %v711
  %v752 = vpack.c.bf16 %v714, %v713
  %v753 = vpack.c.bf16 %v716, %v715
  %v754 = vpack.c.bf16 %v718, %v717
  %v755 = vpack.c.bf16 %v720, %v719
  %v756 = vpack.c.bf16 %v722, %v721
  %v759 = vunpack.c.l.b16 %v723
  %v760 = vunpack.c.h.b16 %v723
  %v761 = vunpack.c.l.b16 %v724
  %v762 = vunpack.c.h.b16 %v724
  %v763 = vpack.c.b16 %v759, %v759
  %v764 = vpack.c.b16 %v760, %v760
  %v765 = vpack.c.b16 %v761, %v761
  %v766 = vpack.c.b16 %v762, %v762
  %771 = vmatprep.subr.bf16.mxu0 0
  %772 = vmatpush1.bf16.msra.mxu0 %v732
  %773 = vmatprep.subr.bf16.mxu0 0
  %774 = vmatpush1.bf16.msra.mxu0 %v731
  %775 = vmatprep.subr.bf16.mxu0 0
  %776 = vmatpush1.bf16.msra.mxu0 %v730
  %777 = vmatprep.subr.bf16.mxu0 0
  %778 = vmatpush1.bf16.msra.mxu0 %v729
  %779 = vmatprep.subr.bf16.mxu0 0
  %780 = vmatpush1.bf16.msra.mxu0 %v728
  %781 = vmatprep.subr.bf16.mxu0 0
  %782 = vmatpush1.bf16.msra.mxu0 %v727
  %783 = vmatprep.subr.bf16.mxu0 0
  %784 = vmatpush1.bf16.msra.mxu0 %v726
  %785 = vmatprep.subr.bf16.mxu0 0
  %786 = vmatpush1.bf16.msra.mxu0 %v725
  %787 = vmatprep.subr.bf16.mxu0 0
  %788 = vmatpush2.bf16.msra.mxu0 %v740
  %789 = vmatprep.subr.bf16.mxu0 0
  %790 = vmatpush2.bf16.msra.mxu0 %v739
  %791 = vmatprep.subr.bf16.mxu0 0
  %792 = vmatpush2.bf16.msra.mxu0 %v738
  %793 = vmatprep.subr.bf16.mxu0 0
  %794 = vmatpush2.bf16.msra.mxu0 %v737
  %795 = vmatprep.subr.bf16.mxu0 0
  %796 = vmatpush2.bf16.msra.mxu0 %v736
  %797 = vmatprep.subr.bf16.mxu0 0
  %798 = vmatpush2.bf16.msra.mxu0 %v735
  %799 = vmatprep.subr.bf16.mxu0 0
  %800 = vmatpush2.bf16.msra.mxu0 %v734
  %801 = vmatprep.subr.bf16.mxu0 0
  %802 = vmatpush2.bf16.msra.mxu0 %v733
  %803 = vmatprep.mubr.bf16.mxu0 %v764
  %804 = vmatmul.mubr.bf16.gmra.mxu0 %v763
  %v805 = vpop.f32.mrf.mxu0
  %v806 = vadd.f32 0.0, %v805
  %v807 = vpop.f32.mrf.mxu0
  %v808 = vpop.f32.mrf.mxu0
  %v809 = vpop.f32.mrf.mxu0
  %810 = vdwg.mxu0
  %811 = vmatprep.subr.bf16.mxu0 0
  %812 = vmatpush1.bf16.msra.mxu0 %v748
  %813 = vmatprep.subr.bf16.mxu0 0
  %814 = vmatpush1.bf16.msra.mxu0 %v747
  %815 = vmatprep.subr.bf16.mxu0 0
  %816 = vmatpush1.bf16.msra.mxu0 %v746
  %817 = vmatprep.subr.bf16.mxu0 0
  %818 = vmatpush1.bf16.msra.mxu0 %v745
  %819 = vmatprep.subr.bf16.mxu0 0
  %820 = vmatpush1.bf16.msra.mxu0 %v744
  %821 = vmatprep.subr.bf16.mxu0 0
  %822 = vmatpush1.bf16.msra.mxu0 %v743
  %823 = vmatprep.subr.bf16.mxu0 0
  %824 = vmatpush1.bf16.msra.mxu0 %v742
  %825 = vmatprep.subr.bf16.mxu0 0
  %826 = vmatpush1.bf16.msra.mxu0 %v741
  %827 = vmatprep.subr.bf16.mxu0 0
  %828 = vmatpush2.bf16.msra.mxu0 %v756
  %829 = vmatprep.subr.bf16.mxu0 0
  %830 = vmatpush2.bf16.msra.mxu0 %v755
  %831 = vmatprep.subr.bf16.mxu0 0
  %832 = vmatpush2.bf16.msra.mxu0 %v754
  %833 = vmatprep.subr.bf16.mxu0 0
  %834 = vmatpush2.bf16.msra.mxu0 %v753
  %835 = vmatprep.subr.bf16.mxu0 0
  %836 = vmatpush2.bf16.msra.mxu0 %v752
  %837 = vmatprep.subr.bf16.mxu0 0
  %838 = vmatpush2.bf16.msra.mxu0 %v751
  %839 = vmatprep.subr.bf16.mxu0 0
  %840 = vmatpush2.bf16.msra.mxu0 %v750
  %841 = vmatprep.subr.bf16.mxu0 0
  %842 = vmatpush2.bf16.msra.mxu0 %v749
  %843 = vmatprep.mubr.bf16.mxu0 %v766
  %844 = vmatmul.mubr.bf16.gmra.mxu0 %v765
  %v845 = vpop.f32.mrf.mxu0
  %v846 = vadd.f32 %v806, %v845
  %v847 = vpop.f32.mrf.mxu0
  %v848 = vpop.f32.mrf.mxu0
  %v849 = vpop.f32.mrf.mxu0
  %850 = vdwg.mxu0
  %v851 = vpack.c.bf16 %v846, %v846
  %v852 = vld [vmem:[%s3] sm:$0xf]
  %v853 = vld [vmem:[%s3 + $0x4] sm:$0xf]
  %v854 = vld [vmem:[%s3 + $0x8] sm:$0xf]
  %v855 = vld [vmem:[%s3 + $0xc] sm:$0xf]
  %v856 = vld [vmem:[%s3 + $0x10] sm:$0xf]
  %v857 = vld [vmem:[%s3 + $0x14] sm:$0xf]
  %v858 = vld [vmem:[%s3 + $0x18] sm:$0xf]
  %v859 = vld [vmem:[%s3 + $0x1c] sm:$0xf]
  %v860 = vld [vmem:[%s3 + $0x20] sm:$0xf]
  %v861 = vld [vmem:[%s3 + $0x24] sm:$0xf]
  %v862 = vld [vmem:[%s3 + $0x28] sm:$0xf]
  %v863 = vld [vmem:[%s3 + $0x2c] sm:$0xf]
  %v864 = vld [vmem:[%s3 + $0x30] sm:$0xf]
  %v865 = vld [vmem:[%s3 + $0x34] sm:$0xf]
  %v866 = vld [vmem:[%s3 + $0x38] sm:$0xf]
  %v867 = vld [vmem:[%s3 + $0x3c] sm:$0xf]
  %v868 = vlaneseq
  %v869 = vshrl.u32 %v868, 7
  %v870 = vsub.s32 0, %v869
  %v871 = vrot.slane %v24, %v870
  %v888 = vunpack.c.l.b16 %v852
  %v889 = vunpack.c.l.b16 %v853
  %v890 = vunpack.c.l.b16 %v854
  %v891 = vunpack.c.l.b16 %v855
  %v892 = vunpack.c.l.b16 %v856
  %v893 = vunpack.c.l.b16 %v857
  %v894 = vunpack.c.l.b16 %v858
  %v895 = vunpack.c.l.b16 %v859
  %v896 = vunpack.c.l.b16 %v860
  %v897 = vunpack.c.l.b16 %v861
  %v898 = vunpack.c.l.b16 %v862
  %v899 = vunpack.c.l.b16 %v863
  %v900 = vunpack.c.l.b16 %v864
  %v901 = vunpack.c.l.b16 %v865
  %v902 = vunpack.c.l.b16 %v866
  %v903 = vunpack.c.l.b16 %v867
  %v904 = vpack.c.b16 %v889, %v888
  %v905 = vpack.c.b16 %v891, %v890
  %v906 = vpack.c.b16 %v893, %v892
  %v907 = vpack.c.b16 %v895, %v894
  %v908 = vpack.c.b16 %v897, %v896
  %v909 = vpack.c.b16 %v899, %v898
  %v910 = vpack.c.b16 %v901, %v900
  %v911 = vpack.c.b16 %v903, %v902
  %920 = vmatprep.subr.bf16.mxu0 0
  %921 = vmatpush1.bf16.msra.mxu0 %v911
  %922 = vmatprep.subr.bf16.mxu0 0
  %923 = vmatpush1.bf16.msra.mxu0 %v910
  %924 = vmatprep.subr.bf16.mxu0 0
  %925 = vmatpush1.bf16.msra.mxu0 %v909
  %926 = vmatprep.subr.bf16.mxu0 0
  %927 = vmatpush1.bf16.msra.mxu0 %v908
  %928 = vmatprep.subr.bf16.mxu0 0
  %929 = vmatpush1.bf16.msra.mxu0 %v907
  %930 = vmatprep.subr.bf16.mxu0 0
  %931 = vmatpush1.bf16.msra.mxu0 %v906
  %932 = vmatprep.subr.bf16.mxu0 0
  %933 = vmatpush1.bf16.msra.mxu0 %v905
  %934 = vmatprep.subr.bf16.mxu0 0
  %935 = vmatpush1.bf16.msra.mxu0 %v904
  %936 = vmatprep.subr.bf16.mxu0 0
  %937 = vmatpush2.bf16.msra.mxu0 0
  %938 = vmatprep.subr.bf16.mxu0 0
  %939 = vmatpush2.bf16.msra.mxu0 0
  %940 = vmatprep.subr.bf16.mxu0 0
  %941 = vmatpush2.bf16.msra.mxu0 0
  %942 = vmatprep.subr.bf16.mxu0 0
  %943 = vmatpush2.bf16.msra.mxu0 0
  %944 = vmatprep.subr.bf16.mxu0 0
  %945 = vmatpush2.bf16.msra.mxu0 0
  %946 = vmatprep.subr.bf16.mxu0 0
  %947 = vmatpush2.bf16.msra.mxu0 0
  %948 = vmatprep.subr.bf16.mxu0 0
  %949 = vmatpush2.bf16.msra.mxu0 0
  %950 = vmatprep.subr.bf16.mxu0 0
  %951 = vmatpush2.bf16.msra.mxu0 0
  %952 = vmatprep.mubr.bf16.mxu0 0
  %953 = vmatmul.mubr.bf16.gmra.mxu0 %v851
  %v954 = vpop.f32.mrf.mxu0
  %v955 = vadd.f32 %v871, %v954
  %v956 = vpop.f32.mrf.mxu0
  %v957 = vpop.f32.mrf.mxu0
  %v958 = vpop.f32.mrf.mxu0
  %959 = vdwg.mxu0
  %v960 = vmax.f32 %v955, 0.0
  %v961 = vpack.c.bf16 %v960, %v960
  %v962 = vld [vmem:[%s4] sm:$0xf]
  %v963 = vld [vmem:[%s4 + $0x4] sm:$0xf]
  %v964 = vld [vmem:[%s4 + $0x8] sm:$0xf]
  %v965 = vld [vmem:[%s4 + $0xc] sm:$0xf]
  %v966 = vld [vmem:[%s4 + $0x10] sm:$0xf]
  %v967 = vld [vmem:[%s4 + $0x14] sm:$0xf]
  %v968 = vld [vmem:[%s4 + $0x18] sm:$0xf]
  %v969 = vld [vmem:[%s4 + $0x1c] sm:$0xf]
  %v970 = vld [vmem:[%s4 + $0x20] sm:$0xf]
  %v971 = vld [vmem:[%s4 + $0x24] sm:$0xf]
  %v972 = vld [vmem:[%s4 + $0x28] sm:$0xf]
  %v973 = vld [vmem:[%s4 + $0x2c] sm:$0xf]
  %v974 = vld [vmem:[%s4 + $0x30] sm:$0xf]
  %v975 = vld [vmem:[%s4 + $0x34] sm:$0xf]
  %v976 = vld [vmem:[%s4 + $0x38] sm:$0xf]
  %v977 = vld [vmem:[%s4 + $0x3c] sm:$0xf]
  %v978 = vlaneseq
  %v979 = vshrl.u32 %v978, 7
  %v980 = vsub.s32 1, %v979
  %v981 = vrot.slane %v24, %v980
  %v998 = vunpack.c.l.b16 %v962
  %v999 = vunpack.c.l.b16 %v963
  %v1000 = vunpack.c.l.b16 %v964
  %v1001 = vunpack.c.l.b16 %v965
  %v1002 = vunpack.c.l.b16 %v966
  %v1003 = vunpack.c.l.b16 %v967
  %v1004 = vunpack.c.l.b16 %v968
  %v1005 = vunpack.c.l.b16 %v969
  %v1006 = vunpack.c.l.b16 %v970
  %v1007 = vunpack.c.l.b16 %v971
  %v1008 = vunpack.c.l.b16 %v972
  %v1009 = vunpack.c.l.b16 %v973
  %v1010 = vunpack.c.l.b16 %v974
  %v1011 = vunpack.c.l.b16 %v975
  %v1012 = vunpack.c.l.b16 %v976
  %v1013 = vunpack.c.l.b16 %v977
  %v1014 = vpack.c.b16 %v999, %v998
  %v1015 = vpack.c.b16 %v1001, %v1000
  %v1016 = vpack.c.b16 %v1003, %v1002
  %v1017 = vpack.c.b16 %v1005, %v1004
  %v1018 = vpack.c.b16 %v1007, %v1006
  %v1019 = vpack.c.b16 %v1009, %v1008
  %v1020 = vpack.c.b16 %v1011, %v1010
  %v1021 = vpack.c.b16 %v1013, %v1012
  %1030 = vmatprep.subr.bf16.mxu0 0
  %1031 = vmatpush1.bf16.msra.mxu0 %v1021
  %1032 = vmatprep.subr.bf16.mxu0 0
  %1033 = vmatpush1.bf16.msra.mxu0 %v1020
  %1034 = vmatprep.subr.bf16.mxu0 0
  %1035 = vmatpush1.bf16.msra.mxu0 %v1019
  %1036 = vmatprep.subr.bf16.mxu0 0
  %1037 = vmatpush1.bf16.msra.mxu0 %v1018
  %1038 = vmatprep.subr.bf16.mxu0 0
  %1039 = vmatpush1.bf16.msra.mxu0 %v1017
  %1040 = vmatprep.subr.bf16.mxu0 0
  %1041 = vmatpush1.bf16.msra.mxu0 %v1016
  %1042 = vmatprep.subr.bf16.mxu0 0
  %1043 = vmatpush1.bf16.msra.mxu0 %v1015
  %1044 = vmatprep.subr.bf16.mxu0 0
  %1045 = vmatpush1.bf16.msra.mxu0 %v1014
  %1046 = vmatprep.subr.bf16.mxu0 0
  %1047 = vmatpush2.bf16.msra.mxu0 0
  %1048 = vmatprep.subr.bf16.mxu0 0
  %1049 = vmatpush2.bf16.msra.mxu0 0
  %1050 = vmatprep.subr.bf16.mxu0 0
  %1051 = vmatpush2.bf16.msra.mxu0 0
  %1052 = vmatprep.subr.bf16.mxu0 0
  %1053 = vmatpush2.bf16.msra.mxu0 0
  %1054 = vmatprep.subr.bf16.mxu0 0
  %1055 = vmatpush2.bf16.msra.mxu0 0
  %1056 = vmatprep.subr.bf16.mxu0 0
  %1057 = vmatpush2.bf16.msra.mxu0 0
  %1058 = vmatprep.subr.bf16.mxu0 0
  %1059 = vmatpush2.bf16.msra.mxu0 0
  %1060 = vmatprep.subr.bf16.mxu0 0
  %1061 = vmatpush2.bf16.msra.mxu0 0
  %1062 = vmatprep.mubr.bf16.mxu0 0
  %1063 = vmatmul.mubr.bf16.gmra.mxu0 %v961
  %v1064 = vpop.f32.mrf.mxu0
  %v1065 = vadd.f32 %v981, %v1064
  %v1066 = vpop.f32.mrf.mxu0
  %v1067 = vpop.f32.mrf.mxu0
  %v1068 = vpop.f32.mrf.mxu0
  %1069 = vdwg.mxu0
  %1070 = vst [vmem:[%s6] sm:$0xff] %v1065
  // Predicated region
  $region26: #{classifier_forward.1} parent=0 // pred_check
    _
  $region27: #{classifier_forward.1} parent=0 // pred_check_branch
    %1072 = sbr.rel (0) target = $region29
  $region28: #{classifier_forward.1} parent=0 // pred_region
    _
  $region29: #{classifier_forward.1} parent=0 // pred_fallthru
    _
  // Predicated region
  $region30: #{classifier_forward.1} parent=0 // pred_check
    _
  $region31: #{classifier_forward.1} parent=0 // pred_check_branch
    %1074 = sbr.rel (0) target = $region33
  $region32: #{classifier_forward.1} parent=0 // pred_region
    _
  $region33: #{classifier_forward.1} parent=0 // pred_fallthru
    _

</llo_original>
